<compile_context>
chip_gen: v7x
topology: tpu7x:2x2x1
jax: 0.10.0
libtpu: 0.0.40
codegen_flags: <defaults>
</compile_context>

<pallas_src>
import jax
import jax.numpy as jnp
import numpy as np
from jax.experimental import pallas as pl
from jax.experimental.pallas import tpu as pltpu

_EPS = 1e-5  # PyTorch BatchNorm2d default


def _fused_conv_bn_relu_kernel(p_ref, w_ref, g_ref, b_ref, o_ref):
    """Fused (im2col-matmul conv) -> BN(batch stats) -> ReLU, all resident in VMEM.

    p_ref : (M, Kp)    bf16  im2col patches, K zero-padded to Kp (multiple of 128)
    w_ref : (Kp, Cout) bf16  folded conv weights, rows ordered (cin, kh, kw), zero-padded
    g_ref : (1, Cout)  f32   BatchNorm gamma
    b_ref : (1, Cout)  f32   BatchNorm beta
    o_ref : (M, Cout)  f32   output rows (n, h, w) flattened, channels last
    """
    # One MXU matmul over the whole batch: K is lane-dense (128), accumulate in f32.
    acc = jnp.dot(p_ref[...], w_ref[...], preferred_element_type=jnp.float32)  # (M, Cout)

    # Training-mode BatchNorm over the full batch (M = N*H*W rows), biased variance.
    inv_count = 1.0 / acc.shape[0]
    mean = jnp.sum(acc, axis=0, keepdims=True) * inv_count            # (1, Cout)
    centered = acc - mean
    var = jnp.sum(centered * centered, axis=0, keepdims=True) * inv_count
    scale = g_ref[...] * jax.lax.rsqrt(var + _EPS)                     # (1, Cout)

    # NOTE: the Conv2d bias is intentionally omitted upstream -- the batch-mean
    # subtraction above cancels any constant per-channel bias exactly.
    o_ref[...] = jnp.maximum(centered * scale + b_ref[...], 0.0).astype(o_ref.dtype)


def conv_block_forward(x_nchw, w_oihw, bias, gamma, beta):
    """Equivalent of ConvBlock.forward (kernel_size=3, stride=1, padding=1),
    BatchNorm2d in training mode (batch statistics, biased variance)."""
    del bias  # mathematically cancelled by the BN batch-mean subtraction (forward output)

    N, Cin, H, W = x_nchw.shape
    Cout, _, KH, KW = w_oihw.shape
    pad = KH // 2
    K = Cin * KH * KW
    Kp = ((K + 127) // 128) * 128        # lane-dense contraction dim
    M = N * H * W

    # ---- wrapper-side im2col (one XLA op), bf16 feed for the MXU ----
    xb = x_nchw.astype(jnp.bfloat16)
    # (N, H, W, Cin*KH*KW) with the feature dim ordered (cin, kh, kw), kw fastest.
    patches = jax.lax.conv_general_dilated_patches(
        xb, (KH, KW), (1, 1), ((pad, pad), (pad, pad)),
        dimension_numbers=("NCHW", "OIHW", "NHWC"))
    patches = jnp.pad(patches.reshape(M, K), ((0, 0), (0, Kp - K)))    # (M, Kp) bf16

    # OIHW -> rows ordered (cin, kh, kw; cin slowest) x Cout cols, K rows zero-padded.
    w_col = jnp.transpose(w_oihw, (1, 2, 3, 0)).reshape(K, Cout)
    w_col = jnp.pad(w_col, ((0, Kp - K), (0, 0))).astype(jnp.bfloat16)  # (Kp, Cout)

    g2 = gamma.astype(jnp.float32).reshape(1, Cout)
    b2 = beta.astype(jnp.float32).reshape(1, Cout)

    # ---- one fused kernel, one grid step (whole batch easily fits in VMEM) ----
    # VMEM footprint ~ patches 128 KiB + weights 2 KiB + output 16 KiB  << 32 MiB.
    # TODO(synk): for large N*H*W that no longer fits VMEM, fall back to a batched
    # grid with a two-phase (stats, then apply) structure.
    out_flat = pl.pallas_call(
        _fused_conv_bn_relu_kernel,
        grid=(1,),
        in_specs=[
            pl.BlockSpec((M, Kp), lambda i: (0, 0)),
            pl.BlockSpec((Kp, Cout), lambda i: (0, 0)),
            pl.BlockSpec((1, Cout), lambda i: (0, 0)),
            pl.BlockSpec((1, Cout), lambda i: (0, 0)),
        ],
        out_specs=pl.BlockSpec((M, Cout), lambda i: (0, 0)),
        out_shape=jax.ShapeDtypeStruct((M, Cout), jnp.float32),
        compiler_params=pltpu.CompilerParams(
            dimension_semantics=("arbitrary",),
            vmem_limit_bytes=32 * 1024 * 1024,   # safe on v5e/v6e and v7x's 64 MiB
        ),
    )(patches, w_col, g2, b2)

    # (M, Cout) -> NCHW (single layout-plumbing op; the reshape is metadata-only).
    return jnp.transpose(out_flat.reshape(N, H, W, Cout), (0, 3, 1, 2))


if __name__ == "__main__":
    # Small shapes: batch=2, in_channels=4, out_channels=8, spatial=16x16
    N, Cin, Cout, H, W = 2, 4, 8, 16, 16
    KH = KW = 3

    key = jax.random.PRNGKey(0)
    kx, kw, kb, kg, kbt = jax.random.split(key, 5)

    x = jax.random.normal(kx, (N, Cin, H, W), dtype=jnp.float32)
    fan_in = Cin * KH * KW
    bound = 1.0 / (fan_in ** 0.5)
    conv_w = jax.random.uniform(kw, (Cout, Cin, KH, KW),
                                minval=-bound, maxval=bound, dtype=jnp.float32)
    conv_b = jax.random.uniform(kb, (Cout,),
                                minval=-bound, maxval=bound, dtype=jnp.float32)
    gamma = 1.0 + 0.1 * jax.random.normal(kg, (Cout,), dtype=jnp.float32)
    beta = 0.1 * jax.random.normal(kbt, (Cout,), dtype=jnp.float32)

    fwd = jax.jit(conv_block_forward)
    out = fwd(x, conv_w, conv_b, gamma, beta)
    jax.block_until_ready(out)
    assert out.shape == (N, Cout, H, W)

    # Reference (includes the conv bias; the kernel relies on BN cancelling it).
    # Conv done in bf16 with f32 accumulation so the only delta vs. the kernel is
    # accumulation order / rsqrt; tolerance is loose anyway.
    pad = KH // 2
    conv_ref = jax.lax.conv_general_dilated(
        x.astype(jnp.bfloat16), conv_w.astype(jnp.bfloat16),
        window_strides=(1, 1), padding=((pad, pad), (pad, pad)),
        dimension_numbers=("NCHW", "OIHW", "NCHW"),
        preferred_element_type=jnp.float32) + conv_b.reshape(1, Cout, 1, 1)
    mean = conv_ref.mean(axis=(0, 2, 3), keepdims=True)
    var = conv_ref.var(axis=(0, 2, 3), keepdims=True)   # biased, as in training forward
    ref = jnp.maximum((conv_ref - mean) / jnp.sqrt(var + _EPS)
                      * gamma.reshape(1, Cout, 1, 1) + beta.reshape(1, Cout, 1, 1), 0.0)
    np.testing.assert_allclose(np.asarray(out), np.asarray(ref), atol=2e-2, rtol=2e-2)

    print("KERNEL_OK")
</pallas_src>

<mosaic_0001>
module attributes {stable_mosaic.version = 11 : i64} {
  func.func @_fused_conv_bn_relu_kernel(%arg0: i32, %arg1: memref<512x128xbf16, #tpu.memory_space<vmem>>, %arg2: memref<128x8xbf16, #tpu.memory_space<vmem>>, %arg3: memref<1x8xf32, #tpu.memory_space<vmem>>, %arg4: memref<1x8xf32, #tpu.memory_space<vmem>>, %arg5: memref<512x8xf32, #tpu.memory_space<vmem>>) attributes {dimension_semantics = [#tpu.dimension_semantics<arbitrary>], iteration_bounds = array<i64: 1>, scalar_prefetch = 0 : i64, scratch_operands = 0 : i64, tpu.core_type = #tpu.core_type<tc>, window_params = [{pipeline_mode = #tpu.pipeline_mode<synchronous>, transform_indices = @transform_0, window_bounds = array<i64: 512, 128>}, {pipeline_mode = #tpu.pipeline_mode<synchronous>, transform_indices = @transform_1, window_bounds = array<i64: 128, 8>}, {pipeline_mode = #tpu.pipeline_mode<synchronous>, transform_indices = @transform_2, window_bounds = array<i64: 1, 8>}, {pipeline_mode = #tpu.pipeline_mode<synchronous>, transform_indices = @transform_3, window_bounds = array<i64: 1, 8>}, {pipeline_mode = #tpu.pipeline_mode<synchronous>, transform_indices = @transform_4, window_bounds = array<i64: 512, 8>}]} {
    %c0 = arith.constant 0 : index
    %c0_0 = arith.constant 0 : index
    %0 = vector.load %arg1[%c0, %c0_0] : memref<512x128xbf16, #tpu.memory_space<vmem>>, vector<512x128xbf16>
    %c0_1 = arith.constant 0 : index
    %c0_2 = arith.constant 0 : index
    %1 = vector.load %arg2[%c0_1, %c0_2] : memref<128x8xbf16, #tpu.memory_space<vmem>>, vector<128x8xbf16>
    %cst = arith.constant dense<0.000000e+00> : vector<512x8xf32>
    %2 = tpu.matmul %0, %1, %cst {dimension_numbers = #tpu.dot_dimension_numbers<[1], [0], [0], [1], [0, 0, 1, 1], [], []>} : vector<512x128xbf16>, vector<128x8xbf16>, vector<512x8xf32> -> vector<512x8xf32>
    %cst_3 = arith.constant dense<0.000000e+00> : vector<8xf32>
    %3 = vector.multi_reduction <add>, %2, %cst_3 [0] : vector<512x8xf32> to vector<8xf32>
    %4 = vector.shape_cast %3 : vector<8xf32> to vector<1x8xf32>
    %cst_4 = arith.constant 0.001953125 : f32
    %5 = vector.broadcast %cst_4 : f32 to vector<1x8xf32>
    %6 = arith.mulf %4, %5 : vector<1x8xf32>
    %7 = vector.broadcast %6 : vector<1x8xf32> to vector<512x8xf32>
    %8 = arith.subf %2, %7 : vector<512x8xf32>
    %9 = arith.mulf %8, %8 : vector<512x8xf32>
    %cst_5 = arith.constant dense<0.000000e+00> : vector<8xf32>
    %10 = vector.multi_reduction <add>, %9, %cst_5 [0] : vector<512x8xf32> to vector<8xf32>
    %11 = vector.shape_cast %10 : vector<8xf32> to vector<1x8xf32>
    %cst_6 = arith.constant 0.001953125 : f32
    %12 = vector.broadcast %cst_6 : f32 to vector<1x8xf32>
    %13 = arith.mulf %11, %12 : vector<1x8xf32>
    %c0_7 = arith.constant 0 : index
    %c0_8 = arith.constant 0 : index
    %14 = vector.load %arg3[%c0_7, %c0_8] : memref<1x8xf32, #tpu.memory_space<vmem>>, vector<1x8xf32>
    %cst_9 = arith.constant 9.99999974E-6 : f32
    %15 = vector.broadcast %cst_9 : f32 to vector<1x8xf32>
    %16 = arith.addf %13, %15 : vector<1x8xf32>
    %17 = math.rsqrt %16 : vector<1x8xf32>
    %18 = arith.mulf %14, %17 : vector<1x8xf32>
    %19 = vector.broadcast %18 : vector<1x8xf32> to vector<512x8xf32>
    %20 = arith.mulf %8, %19 : vector<512x8xf32>
    %c0_10 = arith.constant 0 : index
    %c0_11 = arith.constant 0 : index
    %21 = vector.load %arg4[%c0_10, %c0_11] : memref<1x8xf32, #tpu.memory_space<vmem>>, vector<1x8xf32>
    %22 = vector.broadcast %21 : vector<1x8xf32> to vector<512x8xf32>
    %23 = arith.addf %20, %22 : vector<512x8xf32>
    %cst_12 = arith.constant 0.000000e+00 : f32
    %24 = vector.broadcast %cst_12 : f32 to vector<512x8xf32>
    %25 = arith.maximumf %23, %24 : vector<512x8xf32>
    %c0_13 = arith.constant 0 : index
    %c0_14 = arith.constant 0 : index
    %26 = vector.load %arg5[%c0_13, %c0_14] : memref<512x8xf32, #tpu.memory_space<vmem>>, vector<512x8xf32>
    tpu.vector_store %arg5[%c0_13, %c0_14], %25 {strides = array<i32>} : memref<512x8xf32, #tpu.memory_space<vmem>>, vector<512x8xf32>,
    return
  }
  func.func @transform_0(%arg0: i32) -> (i32, i32) {
    %c0_i32 = arith.constant 0 : i32
    %c0_i32_0 = arith.constant 0 : i32
    %c0_i32_1 = arith.constant 0 : i32
    return %c0_i32, %c0_i32_0 : i32, i32
  }
  func.func @transform_1(%arg0: i32) -> (i32, i32) {
    %c0_i32 = arith.constant 0 : i32
    %c0_i32_0 = arith.constant 0 : i32
    %c0_i32_1 = arith.constant 0 : i32
    return %c0_i32, %c0_i32_0 : i32, i32
  }
  func.func @transform_2(%arg0: i32) -> (i32, i32) {
    %c0_i32 = arith.constant 0 : i32
    %c0_i32_0 = arith.constant 0 : i32
    %c0_i32_1 = arith.constant 0 : i32
    return %c0_i32, %c0_i32_0 : i32, i32
  }
  func.func @transform_3(%arg0: i32) -> (i32, i32) {
    %c0_i32 = arith.constant 0 : i32
    %c0_i32_0 = arith.constant 0 : i32
    %c0_i32_1 = arith.constant 0 : i32
    return %c0_i32, %c0_i32_0 : i32, i32
  }
  func.func @transform_4(%arg0: i32) -> (i32, i32) {
    %c0_i32 = arith.constant 0 : i32
    %c0_i32_0 = arith.constant 0 : i32
    %c0_i32_1 = arith.constant 0 : i32
    return %c0_i32, %c0_i32_0 : i32, i32
  }
}

</mosaic_0001>

<llo_original>
// kernel: conv_block_forward.1
$region0: #{conv_block_forward.1}
  #allocation0 [shape = 'u32[]', space=smem, size = 0x4, offset = 0x4, fixed_abs, tag = 'smem constant byte address 0x4 - core index']
  #allocation1 [shape = 'u32[144,128]{1,0:T(1,128)}', space=vmem, size = 0x12000, scoped, tag = 'internal scratch']
  %s0 = inlined_call_operand.vmem [shape: bf16[512,128], index: 0, kind: input, shape index: {}]
  %s1 = inlined_call_operand.vmem [shape: bf16[128,8], index: 1, kind: input, shape index: {}]
  %s2 = inlined_call_operand.vmem [shape: f32[1,8], index: 2, kind: input, shape index: {}]
  %s3 = inlined_call_operand.vmem [shape: f32[1,8], index: 3, kind: input, shape index: {}]
  %s4 = inlined_call_operand.vmem [shape: f32[512,8], index: 4, kind: output, shape index: {}]
  %s5 = sld [smem:[#allocation0]]
  $region26: #{conv_block_forward.1} parent=0
    _
  %s7 = ssub.s32 1, %s5
  %s8 = scalar_select 0, %s7, %s5
  // Predicated region
  $region2: #{conv_block_forward.1} parent=0 // pred_check
    _
  $region3: #{conv_block_forward.1} parent=0 // pred_check_branch
    %10 = sbr.rel (0) target = $region5
  $region4: #{conv_block_forward.1} parent=0 // pred_region
    _
  $region5: #{conv_block_forward.1} parent=0 // pred_fallthru
    _
  // Predicated region
  $region6: #{conv_block_forward.1} parent=0 // pred_check
    _
  $region7: #{conv_block_forward.1} parent=0 // pred_check_branch
    %12 = sbr.rel (0) target = $region9
  $region8: #{conv_block_forward.1} parent=0 // pred_region
    _
  $region9: #{conv_block_forward.1} parent=0 // pred_fallthru
    _
  // Predicated region
  $region10: #{conv_block_forward.1} parent=0 // pred_check
    _
  $region11: #{conv_block_forward.1} parent=0 // pred_check_branch
    %14 = sbr.rel (0) target = $region13
  $region12: #{conv_block_forward.1} parent=0 // pred_region
    _
  $region13: #{conv_block_forward.1} parent=0 // pred_fallthru
    _
  // Predicated region
  $region14: #{conv_block_forward.1} parent=0 // pred_check
    _
  $region15: #{conv_block_forward.1} parent=0 // pred_check_branch
    %16 = sbr.rel (0) target = $region17
  $region16: #{conv_block_forward.1} parent=0 // pred_region
    _
  $region17: #{conv_block_forward.1} parent=0 // pred_fallthru
    _
  %v18 = vld [vmem:[%s0] sm:$0xf]
  %v19 = vld [vmem:[%s0 + $0x4] sm:$0xf]
  %v20 = vld [vmem:[%s0 + $0x8] sm:$0xf]
  %v21 = vld [vmem:[%s0 + $0xc] sm:$0xf]
  %v22 = vld [vmem:[%s0 + $0x10] sm:$0xf]
  %v23 = vld [vmem:[%s0 + $0x14] sm:$0xf]
  %v24 = vld [vmem:[%s0 + $0x18] sm:$0xf]
  %v25 = vld [vmem:[%s0 + $0x1c] sm:$0xf]
  %v26 = vld [vmem:[%s0 + $0x20] sm:$0xf]
  %v27 = vld [vmem:[%s0 + $0x24] sm:$0xf]
  %v28 = vld [vmem:[%s0 + $0x28] sm:$0xf]
  %v29 = vld [vmem:[%s0 + $0x2c] sm:$0xf]
  %v30 = vld [vmem:[%s0 + $0x30] sm:$0xf]
  %v31 = vld [vmem:[%s0 + $0x34] sm:$0xf]
  %v32 = vld [vmem:[%s0 + $0x38] sm:$0xf]
  %v33 = vld [vmem:[%s0 + $0x3c] sm:$0xf]
  %v34 = vld [vmem:[%s0 + $0x40] sm:$0xf]
  %v35 = vld [vmem:[%s0 + $0x44] sm:$0xf]
  %v36 = vld [vmem:[%s0 + $0x48] sm:$0xf]
  %v37 = vld [vmem:[%s0 + $0x4c] sm:$0xf]
  %v38 = vld [vmem:[%s0 + $0x50] sm:$0xf]
  %v39 = vld [vmem:[%s0 + $0x54] sm:$0xf]
  %v40 = vld [vmem:[%s0 + $0x58] sm:$0xf]
  %v41 = vld [vmem:[%s0 + $0x5c] sm:$0xf]
  %v42 = vld [vmem:[%s0 + $0x60] sm:$0xf]
  %v43 = vld [vmem:[%s0 + $0x64] sm:$0xf]
  %v44 = vld [vmem:[%s0 + $0x68] sm:$0xf]
  %v45 = vld [vmem:[%s0 + $0x6c] sm:$0xf]
  %v46 = vld [vmem:[%s0 + $0x70] sm:$0xf]
  %v47 = vld [vmem:[%s0 + $0x74] sm:$0xf]
  %v48 = vld [vmem:[%s0 + $0x78] sm:$0xf]
  %v49 = vld [vmem:[%s0 + $0x7c] sm:$0xf]
  %v50 = vld [vmem:[%s0 + $0x80] sm:$0xf]
  %v51 = vld [vmem:[%s0 + $0x84] sm:$0xf]
  %v52 = vld [vmem:[%s0 + $0x88] sm:$0xf]
  %v53 = vld [vmem:[%s0 + $0x8c] sm:$0xf]
  %v54 = vld [vmem:[%s0 + $0x90] sm:$0xf]
  %v55 = vld [vmem:[%s0 + $0x94] sm:$0xf]
  %v56 = vld [vmem:[%s0 + $0x98] sm:$0xf]
  %v57 = vld [vmem:[%s0 + $0x9c] sm:$0xf]
  %v58 = vld [vmem:[%s0 + $0xa0] sm:$0xf]
  %v59 = vld [vmem:[%s0 + $0xa4] sm:$0xf]
  %v60 = vld [vmem:[%s0 + $0xa8] sm:$0xf]
  %v61 = vld [vmem:[%s0 + $0xac] sm:$0xf]
  %v62 = vld [vmem:[%s0 + $0xb0] sm:$0xf]
  %v63 = vld [vmem:[%s0 + $0xb4] sm:$0xf]
  %v64 = vld [vmem:[%s0 + $0xb8] sm:$0xf]
  %v65 = vld [vmem:[%s0 + $0xbc] sm:$0xf]
  %v66 = vld [vmem:[%s0 + $0xc0] sm:$0xf]
  %v67 = vld [vmem:[%s0 + $0xc4] sm:$0xf]
  %v68 = vld [vmem:[%s0 + $0xc8] sm:$0xf]
  %v69 = vld [vmem:[%s0 + $0xcc] sm:$0xf]
  %v70 = vld [vmem:[%s0 + $0xd0] sm:$0xf]
  %v71 = vld [vmem:[%s0 + $0xd4] sm:$0xf]
  %v72 = vld [vmem:[%s0 + $0xd8] sm:$0xf]
  %v73 = vld [vmem:[%s0 + $0xdc] sm:$0xf]
  %v74 = vld [vmem:[%s0 + $0xe0] sm:$0xf]
  %v75 = vld [vmem:[%s0 + $0xe4] sm:$0xf]
  %v76 = vld [vmem:[%s0 + $0xe8] sm:$0xf]
  %v77 = vld [vmem:[%s0 + $0xec] sm:$0xf]
  %v78 = vld [vmem:[%s0 + $0xf0] sm:$0xf]
  %v79 = vld [vmem:[%s0 + $0xf4] sm:$0xf]
  %v80 = vld [vmem:[%s0 + $0xf8] sm:$0xf]
  %v81 = vld [vmem:[%s0 + $0xfc] sm:$0xf]
  %v82 = vld [vmem:[%s1] sm:$0xf]
  %v83 = vld [vmem:[%s1 + $0x4] sm:$0xf]
  %v84 = vld [vmem:[%s1 + $0x8] sm:$0xf]
  %v85 = vld [vmem:[%s1 + $0xc] sm:$0xf]
  %v86 = vld [vmem:[%s1 + $0x10] sm:$0xf]
  %v87 = vld [vmem:[%s1 + $0x14] sm:$0xf]
  %v88 = vld [vmem:[%s1 + $0x18] sm:$0xf]
  %v89 = vld [vmem:[%s1 + $0x1c] sm:$0xf]
  %v90 = vld [vmem:[%s1 + $0x20] sm:$0xf]
  %v91 = vld [vmem:[%s1 + $0x24] sm:$0xf]
  %v92 = vld [vmem:[%s1 + $0x28] sm:$0xf]
  %v93 = vld [vmem:[%s1 + $0x2c] sm:$0xf]
  %v94 = vld [vmem:[%s1 + $0x30] sm:$0xf]
  %v95 = vld [vmem:[%s1 + $0x34] sm:$0xf]
  %v96 = vld [vmem:[%s1 + $0x38] sm:$0xf]
  %v97 = vld [vmem:[%s1 + $0x3c] sm:$0xf]
  %v162 = vunpack.c.l.b16 %v18
  %v163 = vunpack.c.l.b16 %v19
  %v164 = vunpack.c.l.b16 %v20
  %v165 = vunpack.c.l.b16 %v21
  %v166 = vunpack.c.l.b16 %v22
  %v167 = vunpack.c.l.b16 %v23
  %v168 = vunpack.c.l.b16 %v24
  %v169 = vunpack.c.l.b16 %v25
  %v170 = vunpack.c.l.b16 %v26
  %v171 = vunpack.c.l.b16 %v27
  %v172 = vunpack.c.l.b16 %v28
  %v173 = vunpack.c.l.b16 %v29
  %v174 = vunpack.c.l.b16 %v30
  %v175 = vunpack.c.l.b16 %v31
  %v176 = vunpack.c.l.b16 %v32
  %v177 = vunpack.c.l.b16 %v33
  %v178 = vunpack.c.l.b16 %v34
  %v179 = vunpack.c.l.b16 %v35
  %v180 = vunpack.c.l.b16 %v36
  %v181 = vunpack.c.l.b16 %v37
  %v182 = vunpack.c.l.b16 %v38
  %v183 = vunpack.c.l.b16 %v39
  %v184 = vunpack.c.l.b16 %v40
  %v185 = vunpack.c.l.b16 %v41
  %v186 = vunpack.c.l.b16 %v42
  %v187 = vunpack.c.l.b16 %v43
  %v188 = vunpack.c.l.b16 %v44
  %v189 = vunpack.c.l.b16 %v45
  %v190 = vunpack.c.l.b16 %v46
  %v191 = vunpack.c.l.b16 %v47
  %v192 = vunpack.c.l.b16 %v48
  %v193 = vunpack.c.l.b16 %v49
  %v194 = vunpack.c.l.b16 %v50
  %v195 = vunpack.c.l.b16 %v51
  %v196 = vunpack.c.l.b16 %v52
  %v197 = vunpack.c.l.b16 %v53
  %v198 = vunpack.c.l.b16 %v54
  %v199 = vunpack.c.l.b16 %v55
  %v200 = vunpack.c.l.b16 %v56
  %v201 = vunpack.c.l.b16 %v57
  %v202 = vunpack.c.l.b16 %v58
  %v203 = vunpack.c.l.b16 %v59
  %v204 = vunpack.c.l.b16 %v60
  %v205 = vunpack.c.l.b16 %v61
  %v206 = vunpack.c.l.b16 %v62
  %v207 = vunpack.c.l.b16 %v63
  %v208 = vunpack.c.l.b16 %v64
  %v209 = vunpack.c.l.b16 %v65
  %v210 = vunpack.c.l.b16 %v66
  %v211 = vunpack.c.l.b16 %v67
  %v212 = vunpack.c.l.b16 %v68
  %v213 = vunpack.c.l.b16 %v69
  %v214 = vunpack.c.l.b16 %v70
  %v215 = vunpack.c.l.b16 %v71
  %v216 = vunpack.c.l.b16 %v72
  %v217 = vunpack.c.l.b16 %v73
  %v218 = vunpack.c.l.b16 %v74
  %v219 = vunpack.c.l.b16 %v75
  %v220 = vunpack.c.l.b16 %v76
  %v221 = vunpack.c.l.b16 %v77
  %v222 = vunpack.c.l.b16 %v78
  %v223 = vunpack.c.l.b16 %v79
  %v224 = vunpack.c.l.b16 %v80
  %v225 = vunpack.c.l.b16 %v81
  %v226 = vpack.c.b16 %v163, %v162
  %v227 = vpack.c.b16 %v165, %v164
  %v228 = vpack.c.b16 %v167, %v166
  %v229 = vpack.c.b16 %v169, %v168
  %v230 = vpack.c.b16 %v171, %v170
  %v231 = vpack.c.b16 %v173, %v172
  %v232 = vpack.c.b16 %v175, %v174
  %v233 = vpack.c.b16 %v177, %v176
  %v234 = vpack.c.b16 %v179, %v178
  %v235 = vpack.c.b16 %v181, %v180
  %v236 = vpack.c.b16 %v183, %v182
  %v237 = vpack.c.b16 %v185, %v184
  %v238 = vpack.c.b16 %v187, %v186
  %v239 = vpack.c.b16 %v189, %v188
  %v240 = vpack.c.b16 %v191, %v190
  %v241 = vpack.c.b16 %v193, %v192
  %v242 = vpack.c.b16 %v195, %v194
  %v243 = vpack.c.b16 %v197, %v196
  %v244 = vpack.c.b16 %v199, %v198
  %v245 = vpack.c.b16 %v201, %v200
  %v246 = vpack.c.b16 %v203, %v202
  %v247 = vpack.c.b16 %v205, %v204
  %v248 = vpack.c.b16 %v207, %v206
  %v249 = vpack.c.b16 %v209, %v208
  %v250 = vpack.c.b16 %v211, %v210
  %v251 = vpack.c.b16 %v213, %v212
  %v252 = vpack.c.b16 %v215, %v214
  %v253 = vpack.c.b16 %v217, %v216
  %v254 = vpack.c.b16 %v219, %v218
  %v255 = vpack.c.b16 %v221, %v220
  %v256 = vpack.c.b16 %v223, %v222
  %v257 = vpack.c.b16 %v225, %v224
  %v306 = vunpack.c.l.b16 %v82
  %v307 = vunpack.c.l.b16 %v83
  %v308 = vunpack.c.l.b16 %v84
  %v309 = vunpack.c.l.b16 %v85
  %v310 = vunpack.c.l.b16 %v86
  %v311 = vunpack.c.l.b16 %v87
  %v312 = vunpack.c.l.b16 %v88
  %v313 = vunpack.c.l.b16 %v89
  %v314 = vunpack.c.l.b16 %v90
  %v315 = vunpack.c.l.b16 %v91
  %v316 = vunpack.c.l.b16 %v92
  %v317 = vunpack.c.l.b16 %v93
  %v318 = vunpack.c.l.b16 %v94
  %v319 = vunpack.c.l.b16 %v95
  %v320 = vunpack.c.l.b16 %v96
  %v321 = vunpack.c.l.b16 %v97
  %v322 = vpack.c.b16 %v307, %v306
  %v323 = vpack.c.b16 %v309, %v308
  %v324 = vpack.c.b16 %v311, %v310
  %v325 = vpack.c.b16 %v313, %v312
  %v326 = vpack.c.b16 %v315, %v314
  %v327 = vpack.c.b16 %v317, %v316
  %v328 = vpack.c.b16 %v319, %v318
  %v329 = vpack.c.b16 %v321, %v320
  %338 = vmatprep.subr.bf16.mxu0 0
  %339 = vmatpush1.bf16.msra.mxu0 %v322
  %340 = vmatprep.subr.bf16.mxu0 0
  %341 = vmatpush1.bf16.msra.mxu0 %v323
  %342 = vmatprep.subr.bf16.mxu0 0
  %343 = vmatpush1.bf16.msra.mxu0 %v324
  %344 = vmatprep.subr.bf16.mxu0 0
  %345 = vmatpush1.bf16.msra.mxu0 %v325
  %346 = vmatprep.subr.bf16.mxu0 0
  %347 = vmatpush1.bf16.msra.mxu0 %v326
  %348 = vmatprep.subr.bf16.mxu0 0
  %349 = vmatpush1.bf16.msra.mxu0 %v327
  %350 = vmatprep.subr.bf16.mxu0 0
  %351 = vmatpush1.bf16.msra.mxu0 %v328
  %352 = vmatprep.subr.bf16.mxu0 0
  %353 = vmatpush1.bf16.msra.mxu0 %v329
  %354 = vmatprep.subr.bf16.mxu0 0
  %355 = vmatpush1.bf16.msra.mxu0 0
  %356 = vmatprep.subr.bf16.mxu0 0
  %357 = vmatpush1.bf16.msra.mxu0 0
  %358 = vmatprep.subr.bf16.mxu0 0
  %359 = vmatpush1.bf16.msra.mxu0 0
  %360 = vmatprep.subr.bf16.mxu0 0
  %361 = vmatpush1.bf16.msra.mxu0 0
  %362 = vmatprep.subr.bf16.mxu0 0
  %363 = vmatpush1.bf16.msra.mxu0 0
  %364 = vmatprep.subr.bf16.mxu0 0
  %365 = vmatpush1.bf16.msra.mxu0 0
  %366 = vmatprep.subr.bf16.mxu0 0
  %367 = vmatpush1.bf16.msra.mxu0 0
  %368 = vmatprep.subr.bf16.mxu0 0
  %369 = vmatpush1.bf16.msra.mxu0 0
  %370 = vmatprep.mubr.bf16.mxu0 0
  %371 = vmatmul.mubr.bf16.gmra.mrb[0].mxu0 %v226
  %v372 = vpop.f32.mrb[0].mxu0
  %v373 = vadd.f32 0.0, %v372
  %v374 = vpop.f32.mrb[0].mxu0
  %v375 = vpop.f32.mrb[0].mxu0
  %v376 = vadd.f32 0.0, %v375
  %v377 = vpop.f32.mrb[0].mxu0
  %378 = vmatprep.mubr.bf16.mxu0 0
  %379 = vmatmul.mubr.bf16.gmra.mrb[0].mxu0 %v227
  %v380 = vpop.f32.mrb[0].mxu0
  %v381 = vadd.f32 0.0, %v380
  %v382 = vpop.f32.mrb[0].mxu0
  %v383 = vpop.f32.mrb[0].mxu0
  %v384 = vadd.f32 0.0, %v383
  %v385 = vpop.f32.mrb[0].mxu0
  %386 = vmatprep.mubr.bf16.mxu0 0
  %387 = vmatmul.mubr.bf16.gmra.mrb[0].mxu0 %v228
  %v388 = vpop.f32.mrb[0].mxu0
  %v389 = vadd.f32 0.0, %v388
  %v390 = vpop.f32.mrb[0].mxu0
  %v391 = vpop.f32.mrb[0].mxu0
  %v392 = vadd.f32 0.0, %v391
  %v393 = vpop.f32.mrb[0].mxu0
  %394 = vmatprep.mubr.bf16.mxu0 0
  %395 = vmatmul.mubr.bf16.gmra.mrb[0].mxu0 %v229
  %v396 = vpop.f32.mrb[0].mxu0
  %v397 = vadd.f32 0.0, %v396
  %v398 = vpop.f32.mrb[0].mxu0
  %v399 = vpop.f32.mrb[0].mxu0
  %v400 = vadd.f32 0.0, %v399
  %v401 = vpop.f32.mrb[0].mxu0
  %402 = vmatprep.mubr.bf16.mxu0 0
  %403 = vmatmul.mubr.bf16.gmra.mrb[0].mxu0 %v230
  %v404 = vpop.f32.mrb[0].mxu0
  %v405 = vadd.f32 0.0, %v404
  %v406 = vpop.f32.mrb[0].mxu0
  %v407 = vpop.f32.mrb[0].mxu0
  %v408 = vadd.f32 0.0, %v407
  %v409 = vpop.f32.mrb[0].mxu0
  %410 = vmatprep.mubr.bf16.mxu0 0
  %411 = vmatmul.mubr.bf16.gmra.mrb[0].mxu0 %v231
  %v412 = vpop.f32.mrb[0].mxu0
  %v413 = vadd.f32 0.0, %v412
  %v414 = vpop.f32.mrb[0].mxu0
  %v415 = vpop.f32.mrb[0].mxu0
  %v416 = vadd.f32 0.0, %v415
  %v417 = vpop.f32.mrb[0].mxu0
  %418 = vmatprep.mubr.bf16.mxu0 0
  %419 = vmatmul.mubr.bf16.gmra.mrb[0].mxu0 %v232
  %v420 = vpop.f32.mrb[0].mxu0
  %v421 = vadd.f32 0.0, %v420
  %v422 = vpop.f32.mrb[0].mxu0
  %v423 = vpop.f32.mrb[0].mxu0
  %v424 = vadd.f32 0.0, %v423
  %v425 = vpop.f32.mrb[0].mxu0
  %426 = vmatprep.mubr.bf16.mxu0 0
  %427 = vmatmul.mubr.bf16.gmra.mrb[0].mxu0 %v233
  %v428 = vpop.f32.mrb[0].mxu0
  %v429 = vadd.f32 0.0, %v428
  %v430 = vpop.f32.mrb[0].mxu0
  %v431 = vpop.f32.mrb[0].mxu0
  %v432 = vadd.f32 0.0, %v431
  %v433 = vpop.f32.mrb[0].mxu0
  %434 = vmatprep.mubr.bf16.mxu0 0
  %435 = vmatmul.mubr.bf16.gmra.mrb[0].mxu0 %v234
  %v436 = vpop.f32.mrb[0].mxu0
  %v437 = vadd.f32 0.0, %v436
  %v438 = vpop.f32.mrb[0].mxu0
  %v439 = vpop.f32.mrb[0].mxu0
  %v440 = vadd.f32 0.0, %v439
  %v441 = vpop.f32.mrb[0].mxu0
  %442 = vmatprep.mubr.bf16.mxu0 0
  %443 = vmatmul.mubr.bf16.gmra.mrb[0].mxu0 %v235
  %v444 = vpop.f32.mrb[0].mxu0
  %v445 = vadd.f32 0.0, %v444
  %v446 = vpop.f32.mrb[0].mxu0
  %v447 = vpop.f32.mrb[0].mxu0
  %v448 = vadd.f32 0.0, %v447
  %v449 = vpop.f32.mrb[0].mxu0
  %450 = vmatprep.mubr.bf16.mxu0 0
  %451 = vmatmul.mubr.bf16.gmra.mrb[0].mxu0 %v236
  %v452 = vpop.f32.mrb[0].mxu0
  %v453 = vadd.f32 0.0, %v452
  %v454 = vpop.f32.mrb[0].mxu0
  %v455 = vpop.f32.mrb[0].mxu0
  %v456 = vadd.f32 0.0, %v455
  %v457 = vpop.f32.mrb[0].mxu0
  %458 = vmatprep.mubr.bf16.mxu0 0
  %459 = vmatmul.mubr.bf16.gmra.mrb[0].mxu0 %v237
  %v460 = vpop.f32.mrb[0].mxu0
  %v461 = vadd.f32 0.0, %v460
  %v462 = vpop.f32.mrb[0].mxu0
  %v463 = vpop.f32.mrb[0].mxu0
  %v464 = vadd.f32 0.0, %v463
  %v465 = vpop.f32.mrb[0].mxu0
  %466 = vmatprep.mubr.bf16.mxu0 0
  %467 = vmatmul.mubr.bf16.gmra.mrb[0].mxu0 %v238
  %v468 = vpop.f32.mrb[0].mxu0
  %v469 = vadd.f32 0.0, %v468
  %v470 = vpop.f32.mrb[0].mxu0
  %v471 = vpop.f32.mrb[0].mxu0
  %v472 = vadd.f32 0.0, %v471
  %v473 = vpop.f32.mrb[0].mxu0
  %474 = vmatprep.mubr.bf16.mxu0 0
  %475 = vmatmul.mubr.bf16.gmra.mrb[0].mxu0 %v239
  %v476 = vpop.f32.mrb[0].mxu0
  %v477 = vadd.f32 0.0, %v476
  %v478 = vpop.f32.mrb[0].mxu0
  %v479 = vpop.f32.mrb[0].mxu0
  %v480 = vadd.f32 0.0, %v479
  %v481 = vpop.f32.mrb[0].mxu0
  %482 = vmatprep.mubr.bf16.mxu0 0
  %483 = vmatmul.mubr.bf16.gmra.mrb[0].mxu0 %v240
  %v484 = vpop.f32.mrb[0].mxu0
  %v485 = vadd.f32 0.0, %v484
  %v486 = vpop.f32.mrb[0].mxu0
  %v487 = vpop.f32.mrb[0].mxu0
  %v488 = vadd.f32 0.0, %v487
  %v489 = vpop.f32.mrb[0].mxu0
  %490 = vmatprep.mubr.bf16.mxu0 0
  %491 = vmatmul.mubr.bf16.gmra.mrb[0].mxu0 %v241
  %v492 = vpop.f32.mrb[0].mxu0
  %v493 = vadd.f32 0.0, %v492
  %v494 = vpop.f32.mrb[0].mxu0
  %v495 = vpop.f32.mrb[0].mxu0
  %v496 = vadd.f32 0.0, %v495
  %v497 = vpop.f32.mrb[0].mxu0
  %498 = vmatprep.mubr.bf16.mxu0 0
  %499 = vmatmul.mubr.bf16.gmra.mrb[0].mxu0 %v242
  %v500 = vpop.f32.mrb[0].mxu0
  %v501 = vadd.f32 0.0, %v500
  %v502 = vpop.f32.mrb[0].mxu0
  %v503 = vpop.f32.mrb[0].mxu0
  %v504 = vadd.f32 0.0, %v503
  %v505 = vpop.f32.mrb[0].mxu0
  %506 = vmatprep.mubr.bf16.mxu0 0
  %507 = vmatmul.mubr.bf16.gmra.mrb[0].mxu0 %v243
  %v508 = vpop.f32.mrb[0].mxu0
  %v509 = vadd.f32 0.0, %v508
  %v510 = vpop.f32.mrb[0].mxu0
  %v511 = vpop.f32.mrb[0].mxu0
  %v512 = vadd.f32 0.0, %v511
  %v513 = vpop.f32.mrb[0].mxu0
  %514 = vmatprep.mubr.bf16.mxu0 0
  %515 = vmatmul.mubr.bf16.gmra.mrb[0].mxu0 %v244
  %v516 = vpop.f32.mrb[0].mxu0
  %v517 = vadd.f32 0.0, %v516
  %v518 = vpop.f32.mrb[0].mxu0
  %v519 = vpop.f32.mrb[0].mxu0
  %v520 = vadd.f32 0.0, %v519
  %v521 = vpop.f32.mrb[0].mxu0
  %522 = vmatprep.mubr.bf16.mxu0 0
  %523 = vmatmul.mubr.bf16.gmra.mrb[0].mxu0 %v245
  %v524 = vpop.f32.mrb[0].mxu0
  %v525 = vadd.f32 0.0, %v524
  %v526 = vpop.f32.mrb[0].mxu0
  %v527 = vpop.f32.mrb[0].mxu0
  %v528 = vadd.f32 0.0, %v527
  %v529 = vpop.f32.mrb[0].mxu0
  %530 = vmatprep.mubr.bf16.mxu0 0
  %531 = vmatmul.mubr.bf16.gmra.mrb[0].mxu0 %v246
  %v532 = vpop.f32.mrb[0].mxu0
  %v533 = vadd.f32 0.0, %v532
  %v534 = vpop.f32.mrb[0].mxu0
  %v535 = vpop.f32.mrb[0].mxu0
  %v536 = vadd.f32 0.0, %v535
  %v537 = vpop.f32.mrb[0].mxu0
  %538 = vmatprep.mubr.bf16.mxu0 0
  %539 = vmatmul.mubr.bf16.gmra.mrb[0].mxu0 %v247
  %v540 = vpop.f32.mrb[0].mxu0
  %v541 = vadd.f32 0.0, %v540
  %v542 = vpop.f32.mrb[0].mxu0
  %v543 = vpop.f32.mrb[0].mxu0
  %v544 = vadd.f32 0.0, %v543
  %v545 = vpop.f32.mrb[0].mxu0
  %546 = vmatprep.mubr.bf16.mxu0 0
  %547 = vmatmul.mubr.bf16.gmra.mrb[0].mxu0 %v248
  %v548 = vpop.f32.mrb[0].mxu0
  %v549 = vadd.f32 0.0, %v548
  %v550 = vpop.f32.mrb[0].mxu0
  %v551 = vpop.f32.mrb[0].mxu0
  %v552 = vadd.f32 0.0, %v551
  %v553 = vpop.f32.mrb[0].mxu0
  %554 = vmatprep.mubr.bf16.mxu0 0
  %555 = vmatmul.mubr.bf16.gmra.mrb[0].mxu0 %v249
  %v556 = vpop.f32.mrb[0].mxu0
  %v557 = vadd.f32 0.0, %v556
  %v558 = vpop.f32.mrb[0].mxu0
  %v559 = vpop.f32.mrb[0].mxu0
  %v560 = vadd.f32 0.0, %v559
  %v561 = vpop.f32.mrb[0].mxu0
  %562 = vmatprep.mubr.bf16.mxu0 0
  %563 = vmatmul.mubr.bf16.gmra.mrb[0].mxu0 %v250
  %v564 = vpop.f32.mrb[0].mxu0
  %v565 = vadd.f32 0.0, %v564
  %v566 = vpop.f32.mrb[0].mxu0
  %v567 = vpop.f32.mrb[0].mxu0
  %v568 = vadd.f32 0.0, %v567
  %v569 = vpop.f32.mrb[0].mxu0
  %570 = vmatprep.mubr.bf16.mxu0 0
  %571 = vmatmul.mubr.bf16.gmra.mrb[0].mxu0 %v251
  %v572 = vpop.f32.mrb[0].mxu0
  %v573 = vadd.f32 0.0, %v572
  %v574 = vpop.f32.mrb[0].mxu0
  %v575 = vpop.f32.mrb[0].mxu0
  %v576 = vadd.f32 0.0, %v575
  %v577 = vpop.f32.mrb[0].mxu0
  %578 = vmatprep.mubr.bf16.mxu0 0
  %579 = vmatmul.mubr.bf16.gmra.mrb[0].mxu0 %v252
  %v580 = vpop.f32.mrb[0].mxu0
  %v581 = vadd.f32 0.0, %v580
  %v582 = vpop.f32.mrb[0].mxu0
  %v583 = vpop.f32.mrb[0].mxu0
  %v584 = vadd.f32 0.0, %v583
  %v585 = vpop.f32.mrb[0].mxu0
  %586 = vmatprep.mubr.bf16.mxu0 0
  %587 = vmatmul.mubr.bf16.gmra.mrb[0].mxu0 %v253
  %v588 = vpop.f32.mrb[0].mxu0
  %v589 = vadd.f32 0.0, %v588
  %v590 = vpop.f32.mrb[0].mxu0
  %v591 = vpop.f32.mrb[0].mxu0
  %v592 = vadd.f32 0.0, %v591
  %v593 = vpop.f32.mrb[0].mxu0
  %594 = vmatprep.mubr.bf16.mxu0 0
  %595 = vmatmul.mubr.bf16.gmra.mrb[0].mxu0 %v254
  %v596 = vpop.f32.mrb[0].mxu0
  %v597 = vadd.f32 0.0, %v596
  %v598 = vpop.f32.mrb[0].mxu0
  %v599 = vpop.f32.mrb[0].mxu0
  %v600 = vadd.f32 0.0, %v599
  %v601 = vpop.f32.mrb[0].mxu0
  %602 = vmatprep.mubr.bf16.mxu0 0
  %603 = vmatmul.mubr.bf16.gmra.mrb[0].mxu0 %v255
  %v604 = vpop.f32.mrb[0].mxu0
  %v605 = vadd.f32 0.0, %v604
  %v606 = vpop.f32.mrb[0].mxu0
  %v607 = vpop.f32.mrb[0].mxu0
  %v608 = vadd.f32 0.0, %v607
  %v609 = vpop.f32.mrb[0].mxu0
  %610 = vmatprep.mubr.bf16.mxu0 0
  %611 = vmatmul.mubr.bf16.gmra.mrb[0].mxu0 %v256
  %v612 = vpop.f32.mrb[0].mxu0
  %v613 = vadd.f32 0.0, %v612
  %v614 = vpop.f32.mrb[0].mxu0
  %v615 = vpop.f32.mrb[0].mxu0
  %v616 = vadd.f32 0.0, %v615
  %v617 = vpop.f32.mrb[0].mxu0
  %618 = vmatprep.mubr.bf16.mxu0 0
  %619 = vmatmul.mubr.bf16.gmra.mrb[0].mxu0 %v257
  %v620 = vpop.f32.mrb[0].mxu0
  %v621 = vadd.f32 0.0, %v620
  %v622 = vpop.f32.mrb[0].mxu0
  %v623 = vpop.f32.mrb[0].mxu0
  %v624 = vadd.f32 0.0, %v623
  %v625 = vpop.f32.mrb[0].mxu0
  %626 = vdwg.mxu0
  %vm627 = vcmask 64512
  %v628 = vsel %vm627, %v373, 0.0
  %v629 = vsel %vm627, %v376, 0.0
  %v630 = vadd.f32 %v628, %v629
  %v631 = vsel %vm627, %v381, 0.0
  %v632 = vadd.f32 %v630, %v631
  %v633 = vsel %vm627, %v384, 0.0
  %v634 = vadd.f32 %v632, %v633
  %v635 = vsel %vm627, %v389, 0.0
  %v636 = vadd.f32 %v634, %v635
  %v637 = vsel %vm627, %v392, 0.0
  %v638 = vadd.f32 %v636, %v637
  %v639 = vsel %vm627, %v397, 0.0
  %v640 = vadd.f32 %v638, %v639
  %v641 = vsel %vm627, %v400, 0.0
  %v642 = vadd.f32 %v640, %v641
  %v643 = vsel %vm627, %v405, 0.0
  %v644 = vadd.f32 %v642, %v643
  %v645 = vsel %vm627, %v408, 0.0
  %v646 = vadd.f32 %v644, %v645
  %v647 = vsel %vm627, %v413, 0.0
  %v648 = vadd.f32 %v646, %v647
  %v649 = vsel %vm627, %v416, 0.0
  %v650 = vadd.f32 %v648, %v649
  %v651 = vsel %vm627, %v421, 0.0
  %v652 = vadd.f32 %v650, %v651
  %v653 = vsel %vm627, %v424, 0.0
  %v654 = vadd.f32 %v652, %v653
  %v655 = vsel %vm627, %v429, 0.0
  %v656 = vadd.f32 %v654, %v655
  %v657 = vsel %vm627, %v432, 0.0
  %v658 = vadd.f32 %v656, %v657
  %v659 = vsel %vm627, %v437, 0.0
  %v660 = vadd.f32 %v658, %v659
  %v661 = vsel %vm627, %v440, 0.0
  %v662 = vadd.f32 %v660, %v661
  %v663 = vsel %vm627, %v445, 0.0
  %v664 = vadd.f32 %v662, %v663
  %v665 = vsel %vm627, %v448, 0.0
  %v666 = vadd.f32 %v664, %v665
  %v667 = vsel %vm627, %v453, 0.0
  %v668 = vadd.f32 %v666, %v667
  %v669 = vsel %vm627, %v456, 0.0
  %v670 = vadd.f32 %v668, %v669
  %v671 = vsel %vm627, %v461, 0.0
  %v672 = vadd.f32 %v670, %v671
  %v673 = vsel %vm627, %v464, 0.0
  %v674 = vadd.f32 %v672, %v673
  %v675 = vsel %vm627, %v469, 0.0
  %v676 = vadd.f32 %v674, %v675
  %v677 = vsel %vm627, %v472, 0.0
  %v678 = vadd.f32 %v676, %v677
  %v679 = vsel %vm627, %v477, 0.0
  %v680 = vadd.f32 %v678, %v679
  %v681 = vsel %vm627, %v480, 0.0
  %v682 = vadd.f32 %v680, %v681
  %v683 = vsel %vm627, %v485, 0.0
  %v684 = vadd.f32 %v682, %v683
  %v685 = vsel %vm627, %v488, 0.0
  %v686 = vadd.f32 %v684, %v685
  %v687 = vsel %vm627, %v493, 0.0
  %v688 = vadd.f32 %v686, %v687
  %v689 = vsel %vm627, %v496, 0.0
  %v690 = vadd.f32 %v688, %v689
  %v691 = vsel %vm627, %v501, 0.0
  %v692 = vadd.f32 %v690, %v691
  %v693 = vsel %vm627, %v504, 0.0
  %v694 = vadd.f32 %v692, %v693
  %v695 = vsel %vm627, %v509, 0.0
  %v696 = vadd.f32 %v694, %v695
  %v697 = vsel %vm627, %v512, 0.0
  %v698 = vadd.f32 %v696, %v697
  %v699 = vsel %vm627, %v517, 0.0
  %v700 = vadd.f32 %v698, %v699
  %v701 = vsel %vm627, %v520, 0.0
  %v702 = vadd.f32 %v700, %v701
  %v703 = vsel %vm627, %v525, 0.0
  %v704 = vadd.f32 %v702, %v703
  %v705 = vsel %vm627, %v528, 0.0
  %v706 = vadd.f32 %v704, %v705
  %v707 = vsel %vm627, %v533, 0.0
  %v708 = vadd.f32 %v706, %v707
  %v709 = vsel %vm627, %v536, 0.0
  %v710 = vadd.f32 %v708, %v709
  %v711 = vsel %vm627, %v541, 0.0
  %v712 = vadd.f32 %v710, %v711
  %v713 = vsel %vm627, %v544, 0.0
  %v714 = vadd.f32 %v712, %v713
  %v715 = vsel %vm627, %v549, 0.0
  %v716 = vadd.f32 %v714, %v715
  %v717 = vsel %vm627, %v552, 0.0
  %v718 = vadd.f32 %v716, %v717
  %v719 = vsel %vm627, %v557, 0.0
  %v720 = vadd.f32 %v718, %v719
  %v721 = vsel %vm627, %v560, 0.0
  %v722 = vadd.f32 %v720, %v721
  %v723 = vsel %vm627, %v565, 0.0
  %v724 = vadd.f32 %v722, %v723
  %v725 = vsel %vm627, %v568, 0.0
  %v726 = vadd.f32 %v724, %v725
  %v727 = vsel %vm627, %v573, 0.0
  %v728 = vadd.f32 %v726, %v727
  %v729 = vsel %vm627, %v576, 0.0
  %v730 = vadd.f32 %v728, %v729
  %v731 = vsel %vm627, %v581, 0.0
  %v732 = vadd.f32 %v730, %v731
  %v733 = vsel %vm627, %v584, 0.0
  %v734 = vadd.f32 %v732, %v733
  %v735 = vsel %vm627, %v589, 0.0
  %v736 = vadd.f32 %v734, %v735
  %v737 = vsel %vm627, %v592, 0.0
  %v738 = vadd.f32 %v736, %v737
  %v739 = vsel %vm627, %v597, 0.0
  %v740 = vadd.f32 %v738, %v739
  %v741 = vsel %vm627, %v600, 0.0
  %v742 = vadd.f32 %v740, %v741
  %v743 = vsel %vm627, %v605, 0.0
  %v744 = vadd.f32 %v742, %v743
  %v745 = vsel %vm627, %v608, 0.0
  %v746 = vadd.f32 %v744, %v745
  %v747 = vsel %vm627, %v613, 0.0
  %v748 = vadd.f32 %v746, %v747
  %v749 = vsel %vm627, %v616, 0.0
  %v750 = vadd.f32 %v748, %v749
  %v751 = vsel %vm627, %v621, 0.0
  %v752 = vadd.f32 %v750, %v751
  %v753 = vsel %vm627, %v624, 0.0
  %v754 = vadd.f32 %v752, %v753
  %v755 = vrot.slane %v754, 4
  %v756 = vadd.f32 %v754, %v755
  %v757 = vrot.slane %v756, 2
  %v758 = vadd.f32 %v756, %v757
  %v759 = vrot.slane %v758, 1
  %v760 = vadd.f32 %v758, %v759
  %v761 = vmul.f32 %v760, 0.001953125
  %v762 = vsub.f32 %v373, %v761
  %v763 = vsub.f32 %v376, %v761
  %v764 = vsub.f32 %v381, %v761
  %v765 = vsub.f32 %v384, %v761
  %v766 = vsub.f32 %v389, %v761
  %v767 = vsub.f32 %v392, %v761
  %v768 = vsub.f32 %v397, %v761
  %v769 = vsub.f32 %v400, %v761
  %v770 = vsub.f32 %v405, %v761
  %v771 = vsub.f32 %v408, %v761
  %v772 = vsub.f32 %v413, %v761
  %v773 = vsub.f32 %v416, %v761
  %v774 = vsub.f32 %v421, %v761
  %v775 = vsub.f32 %v424, %v761
  %v776 = vsub.f32 %v429, %v761
  %v777 = vsub.f32 %v432, %v761
  %v778 = vsub.f32 %v437, %v761
  %v779 = vsub.f32 %v440, %v761
  %v780 = vsub.f32 %v445, %v761
  %v781 = vsub.f32 %v448, %v761
  %v782 = vsub.f32 %v453, %v761
  %v783 = vsub.f32 %v456, %v761
  %v784 = vsub.f32 %v461, %v761
  %v785 = vsub.f32 %v464, %v761
  %v786 = vsub.f32 %v469, %v761
  %v787 = vsub.f32 %v472, %v761
  %v788 = vsub.f32 %v477, %v761
  %v789 = vsub.f32 %v480, %v761
  %v790 = vsub.f32 %v485, %v761
  %v791 = vsub.f32 %v488, %v761
  %v792 = vsub.f32 %v493, %v761
  %v793 = vsub.f32 %v496, %v761
  %v794 = vsub.f32 %v501, %v761
  %v795 = vsub.f32 %v504, %v761
  %v796 = vsub.f32 %v509, %v761
  %v797 = vsub.f32 %v512, %v761
  %v798 = vsub.f32 %v517, %v761
  %v799 = vsub.f32 %v520, %v761
  %v800 = vsub.f32 %v525, %v761
  %v801 = vsub.f32 %v528, %v761
  %v802 = vsub.f32 %v533, %v761
  %v803 = vsub.f32 %v536, %v761
  %v804 = vsub.f32 %v541, %v761
  %v805 = vsub.f32 %v544, %v761
  %v806 = vsub.f32 %v549, %v761
  %v807 = vsub.f32 %v552, %v761
  %v808 = vsub.f32 %v557, %v761
  %v809 = vsub.f32 %v560, %v761
  %v810 = vsub.f32 %v565, %v761
  %v811 = vsub.f32 %v568, %v761
  %v812 = vsub.f32 %v573, %v761
  %v813 = vsub.f32 %v576, %v761
  %v814 = vsub.f32 %v581, %v761
  %v815 = vsub.f32 %v584, %v761
  %v816 = vsub.f32 %v589, %v761
  %v817 = vsub.f32 %v592, %v761
  %v818 = vsub.f32 %v597, %v761
  %v819 = vsub.f32 %v600, %v761
  %v820 = vsub.f32 %v605, %v761
  %v821 = vsub.f32 %v608, %v761
  %v822 = vsub.f32 %v613, %v761
  %v823 = vsub.f32 %v616, %v761
  %v824 = vsub.f32 %v621, %v761
  %v825 = vsub.f32 %v624, %v761
  %v826 = vmul.f32 %v762, %v762
  %v827 = vmul.f32 %v763, %v763
  %v828 = vmul.f32 %v764, %v764
  %v829 = vmul.f32 %v765, %v765
  %v830 = vmul.f32 %v766, %v766
  %v831 = vmul.f32 %v767, %v767
  %v832 = vmul.f32 %v768, %v768
  %v833 = vmul.f32 %v769, %v769
  %v834 = vmul.f32 %v770, %v770
  %v835 = vmul.f32 %v771, %v771
  %v836 = vmul.f32 %v772, %v772
  %v837 = vmul.f32 %v773, %v773
  %v838 = vmul.f32 %v774, %v774
  %v839 = vmul.f32 %v775, %v775
  %v840 = vmul.f32 %v776, %v776
  %v841 = vmul.f32 %v777, %v777
  %v842 = vmul.f32 %v778, %v778
  %v843 = vmul.f32 %v779, %v779
  %v844 = vmul.f32 %v780, %v780
  %v845 = vmul.f32 %v781, %v781
  %v846 = vmul.f32 %v782, %v782
  %v847 = vmul.f32 %v783, %v783
  %v848 = vmul.f32 %v784, %v784
  %v849 = vmul.f32 %v785, %v785
  %v850 = vmul.f32 %v786, %v786
  %v851 = vmul.f32 %v787, %v787
  %v852 = vmul.f32 %v788, %v788
  %v853 = vmul.f32 %v789, %v789
  %v854 = vmul.f32 %v790, %v790
  %v855 = vmul.f32 %v791, %v791
  %v856 = vmul.f32 %v792, %v792
  %v857 = vmul.f32 %v793, %v793
  %v858 = vmul.f32 %v794, %v794
  %v859 = vmul.f32 %v795, %v795
  %v860 = vmul.f32 %v796, %v796
  %v861 = vmul.f32 %v797, %v797
  %v862 = vmul.f32 %v798, %v798
  %v863 = vmul.f32 %v799, %v799
  %v864 = vmul.f32 %v800, %v800
  %v865 = vmul.f32 %v801, %v801
  %v866 = vmul.f32 %v802, %v802
  %v867 = vmul.f32 %v803, %v803
  %v868 = vmul.f32 %v804, %v804
  %v869 = vmul.f32 %v805, %v805
  %v870 = vmul.f32 %v806, %v806
  %v871 = vmul.f32 %v807, %v807
  %v872 = vmul.f32 %v808, %v808
  %v873 = vmul.f32 %v809, %v809
  %v874 = vmul.f32 %v810, %v810
  %v875 = vmul.f32 %v811, %v811
  %v876 = vmul.f32 %v812, %v812
  %v877 = vmul.f32 %v813, %v813
  %v878 = vmul.f32 %v814, %v814
  %v879 = vmul.f32 %v815, %v815
  %v880 = vmul.f32 %v816, %v816
  %v881 = vmul.f32 %v817, %v817
  %v882 = vmul.f32 %v818, %v818
  %v883 = vmul.f32 %v819, %v819
  %v884 = vmul.f32 %v820, %v820
  %v885 = vmul.f32 %v821, %v821
  %v886 = vmul.f32 %v822, %v822
  %v887 = vmul.f32 %v823, %v823
  %v888 = vmul.f32 %v824, %v824
  %v889 = vmul.f32 %v825, %v825
  %v890 = vsel %vm627, %v826, 0.0
  %v891 = vsel %vm627, %v827, 0.0
  %v892 = vadd.f32 %v890, %v891
  %v893 = vsel %vm627, %v828, 0.0
  %v894 = vadd.f32 %v892, %v893
  %v895 = vsel %vm627, %v829, 0.0
  %v896 = vadd.f32 %v894, %v895
  %v897 = vsel %vm627, %v830, 0.0
  %v898 = vadd.f32 %v896, %v897
  %v899 = vsel %vm627, %v831, 0.0
  %v900 = vadd.f32 %v898, %v899
  %v901 = vsel %vm627, %v832, 0.0
  %v902 = vadd.f32 %v900, %v901
  %v903 = vsel %vm627, %v833, 0.0
  %v904 = vadd.f32 %v902, %v903
  %v905 = vsel %vm627, %v834, 0.0
  %v906 = vadd.f32 %v904, %v905
  %v907 = vsel %vm627, %v835, 0.0
  %v908 = vadd.f32 %v906, %v907
  %v909 = vsel %vm627, %v836, 0.0
  %v910 = vadd.f32 %v908, %v909
  %v911 = vsel %vm627, %v837, 0.0
  %v912 = vadd.f32 %v910, %v911
  %v913 = vsel %vm627, %v838, 0.0
  %v914 = vadd.f32 %v912, %v913
  %v915 = vsel %vm627, %v839, 0.0
  %v916 = vadd.f32 %v914, %v915
  %v917 = vsel %vm627, %v840, 0.0
  %v918 = vadd.f32 %v916, %v917
  %v919 = vsel %vm627, %v841, 0.0
  %v920 = vadd.f32 %v918, %v919
  %v921 = vsel %vm627, %v842, 0.0
  %v922 = vadd.f32 %v920, %v921
  %v923 = vsel %vm627, %v843, 0.0
  %v924 = vadd.f32 %v922, %v923
  %v925 = vsel %vm627, %v844, 0.0
  %v926 = vadd.f32 %v924, %v925
  %v927 = vsel %vm627, %v845, 0.0
  %v928 = vadd.f32 %v926, %v927
  %v929 = vsel %vm627, %v846, 0.0
  %v930 = vadd.f32 %v928, %v929
  %v931 = vsel %vm627, %v847, 0.0
  %v932 = vadd.f32 %v930, %v931
  %v933 = vsel %vm627, %v848, 0.0
  %v934 = vadd.f32 %v932, %v933
  %v935 = vsel %vm627, %v849, 0.0
  %v936 = vadd.f32 %v934, %v935
  %v937 = vsel %vm627, %v850, 0.0
  %v938 = vadd.f32 %v936, %v937
  %v939 = vsel %vm627, %v851, 0.0
  %v940 = vadd.f32 %v938, %v939
  %v941 = vsel %vm627, %v852, 0.0
  %v942 = vadd.f32 %v940, %v941
  %v943 = vsel %vm627, %v853, 0.0
  %v944 = vadd.f32 %v942, %v943
  %v945 = vsel %vm627, %v854, 0.0
  %v946 = vadd.f32 %v944, %v945
  %v947 = vsel %vm627, %v855, 0.0
  %v948 = vadd.f32 %v946, %v947
  %v949 = vsel %vm627, %v856, 0.0
  %v950 = vadd.f32 %v948, %v949
  %v951 = vsel %vm627, %v857, 0.0
  %v952 = vadd.f32 %v950, %v951
  %v953 = vsel %vm627, %v858, 0.0
  %v954 = vadd.f32 %v952, %v953
  %v955 = vsel %vm627, %v859, 0.0
  %v956 = vadd.f32 %v954, %v955
  %v957 = vsel %vm627, %v860, 0.0
  %v958 = vadd.f32 %v956, %v957
  %v959 = vsel %vm627, %v861, 0.0
  %v960 = vadd.f32 %v958, %v959
  %v961 = vsel %vm627, %v862, 0.0
  %v962 = vadd.f32 %v960, %v961
  %v963 = vsel %vm627, %v863, 0.0
  %v964 = vadd.f32 %v962, %v963
  %v965 = vsel %vm627, %v864, 0.0
  %v966 = vadd.f32 %v964, %v965
  %v967 = vsel %vm627, %v865, 0.0
  %v968 = vadd.f32 %v966, %v967
  %v969 = vsel %vm627, %v866, 0.0
  %v970 = vadd.f32 %v968, %v969
  %v971 = vsel %vm627, %v867, 0.0
  %v972 = vadd.f32 %v970, %v971
  %v973 = vsel %vm627, %v868, 0.0
  %v974 = vadd.f32 %v972, %v973
  %v975 = vsel %vm627, %v869, 0.0
  %v976 = vadd.f32 %v974, %v975
  %v977 = vsel %vm627, %v870, 0.0
  %v978 = vadd.f32 %v976, %v977
  %v979 = vsel %vm627, %v871, 0.0
  %v980 = vadd.f32 %v978, %v979
  %v981 = vsel %vm627, %v872, 0.0
  %v982 = vadd.f32 %v980, %v981
  %v983 = vsel %vm627, %v873, 0.0
  %v984 = vadd.f32 %v982, %v983
  %v985 = vsel %vm627, %v874, 0.0
  %v986 = vadd.f32 %v984, %v985
  %v987 = vsel %vm627, %v875, 0.0
  %v988 = vadd.f32 %v986, %v987
  %v989 = vsel %vm627, %v876, 0.0
  %v990 = vadd.f32 %v988, %v989
  %v991 = vsel %vm627, %v877, 0.0
  %v992 = vadd.f32 %v990, %v991
  %v993 = vsel %vm627, %v878, 0.0
  %v994 = vadd.f32 %v992, %v993
  %v995 = vsel %vm627, %v879, 0.0
  %v996 = vadd.f32 %v994, %v995
  %v997 = vsel %vm627, %v880, 0.0
  %v998 = vadd.f32 %v996, %v997
  %v999 = vsel %vm627, %v881, 0.0
  %v1000 = vadd.f32 %v998, %v999
  %v1001 = vsel %vm627, %v882, 0.0
  %v1002 = vadd.f32 %v1000, %v1001
  %v1003 = vsel %vm627, %v883, 0.0
  %v1004 = vadd.f32 %v1002, %v1003
  %v1005 = vsel %vm627, %v884, 0.0
  %v1006 = vadd.f32 %v1004, %v1005
  %v1007 = vsel %vm627, %v885, 0.0
  %v1008 = vadd.f32 %v1006, %v1007
  %v1009 = vsel %vm627, %v886, 0.0
  %v1010 = vadd.f32 %v1008, %v1009
  %v1011 = vsel %vm627, %v887, 0.0
  %v1012 = vadd.f32 %v1010, %v1011
  %v1013 = vsel %vm627, %v888, 0.0
  %v1014 = vadd.f32 %v1012, %v1013
  %v1015 = vsel %vm627, %v889, 0.0
  %v1016 = vadd.f32 %v1014, %v1015
  %v1017 = vrot.slane %v1016, 4
  %v1018 = vadd.f32 %v1016, %v1017
  %v1019 = vrot.slane %v1018, 2
  %v1020 = vadd.f32 %v1018, %v1019
  %v1021 = vrot.slane %v1020, 1
  %v1022 = vadd.f32 %v1020, %v1021
  %v1023 = vmul.f32 %v1022, 0.001953125
  %v1024 = vld [vmem:[%s2] sm:$0x1]
  %v1025 = vadd.f32 %v1023, 1e-05
  %v1026 = vrsqrt.pop %v1025
  %v1027 = vmul.f32 %v1024, %v1026
  %v1029 = vlaneseq
  %v1030 = vshrl.u32 %v1029, 7
  %v1031 = vsub.s32 0, %v1030
  %v1032 = vrot.slane %v1027, %v1031
  %v1034 = vmul.f32 %v762, %v1032
  %v1035 = vmul.f32 %v763, %v1032
  %v1036 = vmul.f32 %v764, %v1032
  %v1037 = vmul.f32 %v765, %v1032
  %v1038 = vmul.f32 %v766, %v1032
  %v1039 = vmul.f32 %v767, %v1032
  %v1040 = vmul.f32 %v768, %v1032
  %v1041 = vmul.f32 %v769, %v1032
  %v1042 = vmul.f32 %v770, %v1032
  %v1043 = vmul.f32 %v771, %v1032
  %v1044 = vmul.f32 %v772, %v1032
  %v1045 = vmul.f32 %v773, %v1032
  %v1046 = vmul.f32 %v774, %v1032
  %v1047 = vmul.f32 %v775, %v1032
  %v1048 = vmul.f32 %v776, %v1032
  %v1049 = vmul.f32 %v777, %v1032
  %v1050 = vmul.f32 %v778, %v1032
  %v1051 = vmul.f32 %v779, %v1032
  %v1052 = vmul.f32 %v780, %v1032
  %v1053 = vmul.f32 %v781, %v1032
  %v1054 = vmul.f32 %v782, %v1032
  %v1055 = vmul.f32 %v783, %v1032
  %v1056 = vmul.f32 %v784, %v1032
  %v1057 = vmul.f32 %v785, %v1032
  %v1058 = vmul.f32 %v786, %v1032
  %v1059 = vmul.f32 %v787, %v1032
  %v1060 = vmul.f32 %v788, %v1032
  %v1061 = vmul.f32 %v789, %v1032
  %v1062 = vmul.f32 %v790, %v1032
  %v1063 = vmul.f32 %v791, %v1032
  %v1064 = vmul.f32 %v792, %v1032
  %v1065 = vmul.f32 %v793, %v1032
  %v1066 = vmul.f32 %v794, %v1032
  %v1067 = vmul.f32 %v795, %v1032
  %v1068 = vmul.f32 %v796, %v1032
  %v1069 = vmul.f32 %v797, %v1032
  %v1070 = vmul.f32 %v798, %v1032
  %v1071 = vmul.f32 %v799, %v1032
  %v1072 = vmul.f32 %v800, %v1032
  %v1073 = vmul.f32 %v801, %v1032
  %v1074 = vmul.f32 %v802, %v1032
  %v1075 = vmul.f32 %v803, %v1032
  %v1076 = vmul.f32 %v804, %v1032
  %v1077 = vmul.f32 %v805, %v1032
  %v1078 = vmul.f32 %v806, %v1032
  %v1079 = vmul.f32 %v807, %v1032
  %v1080 = vmul.f32 %v808, %v1032
  %v1081 = vmul.f32 %v809, %v1032
  %v1082 = vmul.f32 %v810, %v1032
  %v1083 = vmul.f32 %v811, %v1032
  %v1084 = vmul.f32 %v812, %v1032
  %v1085 = vmul.f32 %v813, %v1032
  %v1086 = vmul.f32 %v814, %v1032
  %v1087 = vmul.f32 %v815, %v1032
  %v1088 = vmul.f32 %v816, %v1032
  %v1089 = vmul.f32 %v817, %v1032
  %v1090 = vmul.f32 %v818, %v1032
  %v1091 = vmul.f32 %v819, %v1032
  %v1092 = vmul.f32 %v820, %v1032
  %v1093 = vmul.f32 %v821, %v1032
  %v1094 = vmul.f32 %v822, %v1032
  %v1095 = vmul.f32 %v823, %v1032
  %v1096 = vmul.f32 %v824, %v1032
  %v1097 = vmul.f32 %v825, %v1032
  %v1098 = vld [vmem:[%s3] sm:$0x1]
  %v1100 = vlaneseq
  %v1101 = vshrl.u32 %v1100, 7
  %v1102 = vsub.s32 0, %v1101
  %v1103 = vrot.slane %v1098, %v1102
  %v1105 = vadd.f32 %v1034, %v1103
  %v1106 = vadd.f32 %v1035, %v1103
  %v1107 = vadd.f32 %v1036, %v1103
  %v1108 = vadd.f32 %v1037, %v1103
  %v1109 = vadd.f32 %v1038, %v1103
  %v1110 = vadd.f32 %v1039, %v1103
  %v1111 = vadd.f32 %v1040, %v1103
  %v1112 = vadd.f32 %v1041, %v1103
  %v1113 = vadd.f32 %v1042, %v1103
  %v1114 = vadd.f32 %v1043, %v1103
  %v1115 = vadd.f32 %v1044, %v1103
  %v1116 = vadd.f32 %v1045, %v1103
  %v1117 = vadd.f32 %v1046, %v1103
  %v1118 = vadd.f32 %v1047, %v1103
  %v1119 = vadd.f32 %v1048, %v1103
  %v1120 = vadd.f32 %v1049, %v1103
  %v1121 = vadd.f32 %v1050, %v1103
  %v1122 = vadd.f32 %v1051, %v1103
  %v1123 = vadd.f32 %v1052, %v1103
  %v1124 = vadd.f32 %v1053, %v1103
  %v1125 = vadd.f32 %v1054, %v1103
  %v1126 = vadd.f32 %v1055, %v1103
  %v1127 = vadd.f32 %v1056, %v1103
  %v1128 = vadd.f32 %v1057, %v1103
  %v1129 = vadd.f32 %v1058, %v1103
  %v1130 = vadd.f32 %v1059, %v1103
  %v1131 = vadd.f32 %v1060, %v1103
  %v1132 = vadd.f32 %v1061, %v1103
  %v1133 = vadd.f32 %v1062, %v1103
  %v1134 = vadd.f32 %v1063, %v1103
  %v1135 = vadd.f32 %v1064, %v1103
  %v1136 = vadd.f32 %v1065, %v1103
  %v1137 = vadd.f32 %v1066, %v1103
  %v1138 = vadd.f32 %v1067, %v1103
  %v1139 = vadd.f32 %v1068, %v1103
  %v1140 = vadd.f32 %v1069, %v1103
  %v1141 = vadd.f32 %v1070, %v1103
  %v1142 = vadd.f32 %v1071, %v1103
  %v1143 = vadd.f32 %v1072, %v1103
  %v1144 = vadd.f32 %v1073, %v1103
  %v1145 = vadd.f32 %v1074, %v1103
  %v1146 = vadd.f32 %v1075, %v1103
  %v1147 = vadd.f32 %v1076, %v1103
  %v1148 = vadd.f32 %v1077, %v1103
  %v1149 = vadd.f32 %v1078, %v1103
  %v1150 = vadd.f32 %v1079, %v1103
  %v1151 = vadd.f32 %v1080, %v1103
  %v1152 = vadd.f32 %v1081, %v1103
  %v1153 = vadd.f32 %v1082, %v1103
  %v1154 = vadd.f32 %v1083, %v1103
  %v1155 = vadd.f32 %v1084, %v1103
  %v1156 = vadd.f32 %v1085, %v1103
  %v1157 = vadd.f32 %v1086, %v1103
  %v1158 = vadd.f32 %v1087, %v1103
  %v1159 = vadd.f32 %v1088, %v1103
  %v1160 = vadd.f32 %v1089, %v1103
  %v1161 = vadd.f32 %v1090, %v1103
  %v1162 = vadd.f32 %v1091, %v1103
  %v1163 = vadd.f32 %v1092, %v1103
  %v1164 = vadd.f32 %v1093, %v1103
  %v1165 = vadd.f32 %v1094, %v1103
  %v1166 = vadd.f32 %v1095, %v1103
  %v1167 = vadd.f32 %v1096, %v1103
  %v1168 = vadd.f32 %v1097, %v1103
  %v1169 = vmax.f32 %v1105, 0.0
  %v1170 = vmax.f32 %v1106, 0.0
  %v1171 = vmax.f32 %v1107, 0.0
  %v1172 = vmax.f32 %v1108, 0.0
  %v1173 = vmax.f32 %v1109, 0.0
  %v1174 = vmax.f32 %v1110, 0.0
  %v1175 = vmax.f32 %v1111, 0.0
  %v1176 = vmax.f32 %v1112, 0.0
  %v1177 = vmax.f32 %v1113, 0.0
  %v1178 = vmax.f32 %v1114, 0.0
  %v1179 = vmax.f32 %v1115, 0.0
  %v1180 = vmax.f32 %v1116, 0.0
  %v1181 = vmax.f32 %v1117, 0.0
  %v1182 = vmax.f32 %v1118, 0.0
  %v1183 = vmax.f32 %v1119, 0.0
  %v1184 = vmax.f32 %v1120, 0.0
  %v1185 = vmax.f32 %v1121, 0.0
  %v1186 = vmax.f32 %v1122, 0.0
  %v1187 = vmax.f32 %v1123, 0.0
  %v1188 = vmax.f32 %v1124, 0.0
  %v1189 = vmax.f32 %v1125, 0.0
  %v1190 = vmax.f32 %v1126, 0.0
  %v1191 = vmax.f32 %v1127, 0.0
  %v1192 = vmax.f32 %v1128, 0.0
  %v1193 = vmax.f32 %v1129, 0.0
  %v1194 = vmax.f32 %v1130, 0.0
  %v1195 = vmax.f32 %v1131, 0.0
  %v1196 = vmax.f32 %v1132, 0.0
  %v1197 = vmax.f32 %v1133, 0.0
  %v1198 = vmax.f32 %v1134, 0.0
  %v1199 = vmax.f32 %v1135, 0.0
  %v1200 = vmax.f32 %v1136, 0.0
  %v1201 = vmax.f32 %v1137, 0.0
  %v1202 = vmax.f32 %v1138, 0.0
  %v1203 = vmax.f32 %v1139, 0.0
  %v1204 = vmax.f32 %v1140, 0.0
  %v1205 = vmax.f32 %v1141, 0.0
  %v1206 = vmax.f32 %v1142, 0.0
  %v1207 = vmax.f32 %v1143, 0.0
  %v1208 = vmax.f32 %v1144, 0.0
  %v1209 = vmax.f32 %v1145, 0.0
  %v1210 = vmax.f32 %v1146, 0.0
  %v1211 = vmax.f32 %v1147, 0.0
  %v1212 = vmax.f32 %v1148, 0.0
  %v1213 = vmax.f32 %v1149, 0.0
  %v1214 = vmax.f32 %v1150, 0.0
  %v1215 = vmax.f32 %v1151, 0.0
  %v1216 = vmax.f32 %v1152, 0.0
  %v1217 = vmax.f32 %v1153, 0.0
  %v1218 = vmax.f32 %v1154, 0.0
  %v1219 = vmax.f32 %v1155, 0.0
  %v1220 = vmax.f32 %v1156, 0.0
  %v1221 = vmax.f32 %v1157, 0.0
  %v1222 = vmax.f32 %v1158, 0.0
  %v1223 = vmax.f32 %v1159, 0.0
  %v1224 = vmax.f32 %v1160, 0.0
  %v1225 = vmax.f32 %v1161, 0.0
  %v1226 = vmax.f32 %v1162, 0.0
  %v1227 = vmax.f32 %v1163, 0.0
  %v1228 = vmax.f32 %v1164, 0.0
  %v1229 = vmax.f32 %v1165, 0.0
  %v1230 = vmax.f32 %v1166, 0.0
  %v1231 = vmax.f32 %v1167, 0.0
  %v1232 = vmax.f32 %v1168, 0.0
  %1233 = vst.msk [vmem:[%s4] sm:$0xff] %vm627, %v1169
  %1234 = vst.msk [vmem:[%s4 + $0x8] sm:$0xff] %vm627, %v1170
  %1235 = vst.msk [vmem:[%s4 + $0x10] sm:$0xff] %vm627, %v1171
  %1236 = vst.msk [vmem:[%s4 + $0x18] sm:$0xff] %vm627, %v1172
  %1237 = vst.msk [vmem:[%s4 + $0x20] sm:$0xff] %vm627, %v1173
  %1238 = vst.msk [vmem:[%s4 + $0x28] sm:$0xff] %vm627, %v1174
  %1239 = vst.msk [vmem:[%s4 + $0x30] sm:$0xff] %vm627, %v1175
  %1240 = vst.msk [vmem:[%s4 + $0x38] sm:$0xff] %vm627, %v1176
  %1241 = vst.msk [vmem:[%s4 + $0x40] sm:$0xff] %vm627, %v1177
  %1242 = vst.msk [vmem:[%s4 + $0x48] sm:$0xff] %vm627, %v1178
  %1243 = vst.msk [vmem:[%s4 + $0x50] sm:$0xff] %vm627, %v1179
  %1244 = vst.msk [vmem:[%s4 + $0x58] sm:$0xff] %vm627, %v1180
  %1245 = vst.msk [vmem:[%s4 + $0x60] sm:$0xff] %vm627, %v1181
  %1246 = vst.msk [vmem:[%s4 + $0x68] sm:$0xff] %vm627, %v1182
  %1247 = vst.msk [vmem:[%s4 + $0x70] sm:$0xff] %vm627, %v1183
  %1248 = vst.msk [vmem:[%s4 + $0x78] sm:$0xff] %vm627, %v1184
  %1249 = vst.msk [vmem:[%s4 + $0x80] sm:$0xff] %vm627, %v1185
  %1250 = vst.msk [vmem:[%s4 + $0x88] sm:$0xff] %vm627, %v1186
  %1251 = vst.msk [vmem:[%s4 + $0x90] sm:$0xff] %vm627, %v1187
  %1252 = vst.msk [vmem:[%s4 + $0x98] sm:$0xff] %vm627, %v1188
  %1253 = vst.msk [vmem:[%s4 + $0xa0] sm:$0xff] %vm627, %v1189
  %1254 = vst.msk [vmem:[%s4 + $0xa8] sm:$0xff] %vm627, %v1190
  %1255 = vst.msk [vmem:[%s4 + $0xb0] sm:$0xff] %vm627, %v1191
  %1256 = vst.msk [vmem:[%s4 + $0xb8] sm:$0xff] %vm627, %v1192
  %1257 = vst.msk [vmem:[%s4 + $0xc0] sm:$0xff] %vm627, %v1193
  %1258 = vst.msk [vmem:[%s4 + $0xc8] sm:$0xff] %vm627, %v1194
  %1259 = vst.msk [vmem:[%s4 + $0xd0] sm:$0xff] %vm627, %v1195
  %1260 = vst.msk [vmem:[%s4 + $0xd8] sm:$0xff] %vm627, %v1196
  %1261 = vst.msk [vmem:[%s4 + $0xe0] sm:$0xff] %vm627, %v1197
  %1262 = vst.msk [vmem:[%s4 + $0xe8] sm:$0xff] %vm627, %v1198
  %1263 = vst.msk [vmem:[%s4 + $0xf0] sm:$0xff] %vm627, %v1199
  %1264 = vst.msk [vmem:[%s4 + $0xf8] sm:$0xff] %vm627, %v1200
  %1265 = vst.msk [vmem:[%s4 + $0x100] sm:$0xff] %vm627, %v1201
  %1266 = vst.msk [vmem:[%s4 + $0x108] sm:$0xff] %vm627, %v1202
  %1267 = vst.msk [vmem:[%s4 + $0x110] sm:$0xff] %vm627, %v1203
  %1268 = vst.msk [vmem:[%s4 + $0x118] sm:$0xff] %vm627, %v1204
  %1269 = vst.msk [vmem:[%s4 + $0x120] sm:$0xff] %vm627, %v1205
  %1270 = vst.msk [vmem:[%s4 + $0x128] sm:$0xff] %vm627, %v1206
  %1271 = vst.msk [vmem:[%s4 + $0x130] sm:$0xff] %vm627, %v1207
  %1272 = vst.msk [vmem:[%s4 + $0x138] sm:$0xff] %vm627, %v1208
  %1273 = vst.msk [vmem:[%s4 + $0x140] sm:$0xff] %vm627, %v1209
  %1274 = vst.msk [vmem:[%s4 + $0x148] sm:$0xff] %vm627, %v1210
  %1275 = vst.msk [vmem:[%s4 + $0x150] sm:$0xff] %vm627, %v1211
  %1276 = vst.msk [vmem:[%s4 + $0x158] sm:$0xff] %vm627, %v1212
  %1277 = vst.msk [vmem:[%s4 + $0x160] sm:$0xff] %vm627, %v1213
  %1278 = vst.msk [vmem:[%s4 + $0x168] sm:$0xff] %vm627, %v1214
  %1279 = vst.msk [vmem:[%s4 + $0x170] sm:$0xff] %vm627, %v1215
  %1280 = vst.msk [vmem:[%s4 + $0x178] sm:$0xff] %vm627, %v1216
  %1281 = vst.msk [vmem:[%s4 + $0x180] sm:$0xff] %vm627, %v1217
  %1282 = vst.msk [vmem:[%s4 + $0x188] sm:$0xff] %vm627, %v1218
  %1283 = vst.msk [vmem:[%s4 + $0x190] sm:$0xff] %vm627, %v1219
  %1284 = vst.msk [vmem:[%s4 + $0x198] sm:$0xff] %vm627, %v1220
  %1285 = vst.msk [vmem:[%s4 + $0x1a0] sm:$0xff] %vm627, %v1221
  %1286 = vst.msk [vmem:[%s4 + $0x1a8] sm:$0xff] %vm627, %v1222
  %1287 = vst.msk [vmem:[%s4 + $0x1b0] sm:$0xff] %vm627, %v1223
  %1288 = vst.msk [vmem:[%s4 + $0x1b8] sm:$0xff] %vm627, %v1224
  %1289 = vst.msk [vmem:[%s4 + $0x1c0] sm:$0xff] %vm627, %v1225
  %1290 = vst.msk [vmem:[%s4 + $0x1c8] sm:$0xff] %vm627, %v1226
  %1291 = vst.msk [vmem:[%s4 + $0x1d0] sm:$0xff] %vm627, %v1227
  %1292 = vst.msk [vmem:[%s4 + $0x1d8] sm:$0xff] %vm627, %v1228
  %1293 = vst.msk [vmem:[%s4 + $0x1e0] sm:$0xff] %vm627, %v1229
  %1294 = vst.msk [vmem:[%s4 + $0x1e8] sm:$0xff] %vm627, %v1230
  %1295 = vst.msk [vmem:[%s4 + $0x1f0] sm:$0xff] %vm627, %v1231
  %1296 = vst.msk [vmem:[%s4 + $0x1f8] sm:$0xff] %vm627, %v1232
  // Predicated region
  $region18: #{conv_block_forward.1} parent=0 // pred_check
    _
  $region19: #{conv_block_forward.1} parent=0 // pred_check_branch
    %1298 = sbr.rel (0) target = $region21
  $region20: #{conv_block_forward.1} parent=0 // pred_region
    _
  $region21: #{conv_block_forward.1} parent=0 // pred_fallthru
    _
  // Predicated region
  $region22: #{conv_block_forward.1} parent=0 // pred_check
    _
  $region23: #{conv_block_forward.1} parent=0 // pred_check_branch
    %1300 = sbr.rel (0) target = $region25
  $region24: #{conv_block_forward.1} parent=0 // pred_region
    _
  $region25: #{conv_block_forward.1} parent=0 // pred_fallthru
    _

</llo_original>
